<compile_context>
chip_gen: v5e
topology: v5e:2x2
jax: 0.10.0
libtpu: 0.0.40
codegen_flags: <defaults>
</compile_context>

<pallas_src>
import jax
import jax.numpy as jnp
from jax.experimental import pallas as pl
from jax.experimental.pallas import tpu as pltpu


LANE = 128  # TPU lane width; feature / community dims are zero-padded to this.


def _round_up(x, m=LANE):
    return ((x + m - 1) // m) * m


def _pad_axis(x, axis, target):
    pad = target - x.shape[axis]
    if pad <= 0:
        return x
    widths = [(0, 0)] * x.ndim
    widths[axis] = (0, pad)
    return jnp.pad(x, widths)


# ----------------------------- Pallas kernel --------------------------------
def residual_block_kernel(a_ref, x_ref, c_ref, cnT_ref, w_ref, b_ref, out_ref):
    """Fused Residual_Block: X1 = gnn1(X); out = X1 + gnn2(X1).

    All operands are VMEM-resident (single dispatch); X1 never leaves the chip.
    Matmul inputs are bf16 (native MXU dtype); accumulation, bias, ReLU and the
    residual add stay f32.
    """
    a = a_ref[...]        # (N, N)     bf16 row-normalized adjacency (+ self loops)
    c = c_ref[...]        # (N, Kp)    bf16 one-hot community assignment
    cnT = cnT_ref[...]    # (Kp, N)    bf16 community mean-pool operator
    b_all = b_ref[...]    # (2, Dp)    f32 biases [b1; b2]

    def msgnn(x_bf, w1, w2, b):
        # scale 1: local neighborhood aggregation  (A_hat @ X) @ W1
        # TODO(synk): at large N replace dense A with a CSR/segment-sum gather
        #             path via PrefetchScalarGridSpec (dense A is HBM-bound).
        ax = jnp.dot(a, x_bf, preferred_element_type=jnp.float32)            # (N, Dp)
        # scale 2 (re-associated): pooled @ W2 is only (Kp, Dp) before the cheap
        # C broadcast back to nodes -> K*Din*Dout + N*K*Dout flops instead of
        # N*K*Din + N*Din*Dout, and no (N, Din) 'comb' intermediate.
        pooled = jnp.dot(cnT, x_bf, preferred_element_type=jnp.float32)      # (Kp, Dp)
        pw = jnp.dot(pooled.astype(jnp.bfloat16), w2,
                     preferred_element_type=jnp.float32)                     # (Kp, Dp)
        h = (jnp.dot(ax.astype(jnp.bfloat16), w1,
                     preferred_element_type=jnp.float32)
             + jnp.dot(c, pw.astype(jnp.bfloat16),
                       preferred_element_type=jnp.float32)
             + b)                                                            # (N, Dp)
        return jnp.maximum(h, 0.0)

    x1 = msgnn(x_ref[...], w_ref[0], w_ref[1], b_all[0:1])                   # gnn1(X)
    x2 = msgnn(x1.astype(jnp.bfloat16), w_ref[2], w_ref[3], b_all[1:2])      # gnn2(X1)
    out_ref[...] = x1 + x2                                                   # residual


def residual_block_pallas(A_bf, X_bf, C_bf, CnT_bf, Wpack, bpack):
    """One pallas_call, no grid: every operand lives whole in VMEM.

    TODO(synk): at large N add a node-dim grid axis marked "parallel" (uses
    v7x's 2nd TensorCore), hold X1 in persistent VMEM scratch or split into two
    calls, and size node tiles against 16 MiB (v5e) / 32 MiB (v6e) / 64 MiB
    (v7x) budgets with bf16 A.
    """
    n, dp = X_bf.shape
    specs = [pl.BlockSpec(memory_space=pltpu.MemorySpace.VMEM) for _ in range(6)]
    return pl.pallas_call(
        residual_block_kernel,
        out_shape=jax.ShapeDtypeStruct((n, dp), jnp.float32),
        in_specs=specs,
        out_specs=pl.BlockSpec(memory_space=pltpu.MemorySpace.VMEM),
        compiler_params=pltpu.CompilerParams(vmem_limit_bytes=32 * 1024 * 1024),
    )(A_bf, X_bf, C_bf, CnT_bf, Wpack, bpack)


# ----------------------------- glue (plain JAX) ------------------------------
def build_adjacency(edge_index, n):
    """Dense row-normalized adjacency with self-loops (A_hat = D^-1 (A + I))."""
    src, dst = edge_index[0], edge_index[1]
    A = jnp.zeros((n, n), jnp.float32).at[dst, src].set(1.0)
    A = A + jnp.eye(n, dtype=jnp.float32)
    deg = jnp.maximum(A.sum(axis=1, keepdims=True), 1.0)
    return A / deg


def build_community_mats(com_div, com_num):
    """C: (N, K) one-hot assignment.  CnT: (K, N) mean-pooling operator."""
    C = jax.nn.one_hot(com_div, com_num, dtype=jnp.float32)        # (N, K)
    counts = jnp.maximum(C.sum(axis=0), 1.0)                       # (K,)
    CnT = (C / counts[None, :]).T                                  # (K, N)
    return C, CnT


def init_msgnn_params(key, in_dim, out_dim):
    k1, k2 = jax.random.split(key)
    s1 = 1.0 / jnp.sqrt(jnp.float32(in_dim))
    W1 = jax.random.uniform(k1, (in_dim, out_dim), jnp.float32, -s1, s1)
    W2 = jax.random.uniform(k2, (in_dim, out_dim), jnp.float32, -s1, s1)
    b = jnp.zeros((1, out_dim), jnp.float32)
    return W1, W2, b


def prepare_operands(X, edge_index, com_div, params1, params2, com_num):
    """Hoisted pre-processing: operator construction, lane-dense padding,
    parameter packing, bf16 casting.  If edge_index / com_div / params are
    static across calls, run this once; the per-call path is then a single
    jitted pallas_call."""
    n, din = X.shape
    dout = params1[0].shape[1]
    dp = max(_round_up(din), _round_up(dout))   # lane-dense feature dim
    kp = _round_up(com_num)                     # lane-dense community dim

    A = build_adjacency(edge_index, n).astype(jnp.bfloat16)         # (N, N)
    C, CnT = build_community_mats(com_div, com_num)
    C = _pad_axis(C, 1, kp).astype(jnp.bfloat16)                    # (N, Kp)
    CnT = _pad_axis(CnT, 0, kp).astype(jnp.bfloat16)                # (Kp, N)
    Xp = _pad_axis(X, 1, dp).astype(jnp.bfloat16)                   # (N, Dp)

    def pad_w(w):
        return _pad_axis(_pad_axis(w, 0, dp), 1, dp)

    W1a, W2a, ba = params1
    W1b, W2b, bb = params2
    Wpack = jnp.stack([pad_w(W1a), pad_w(W2a),
                       pad_w(W1b), pad_w(W2b)]).astype(jnp.bfloat16)  # (4, Dp, Dp)
    bpack = jnp.concatenate([_pad_axis(ba, 1, dp),
                             _pad_axis(bb, 1, dp)], axis=0)           # (2, Dp) f32
    return A, Xp, C, CnT, Wpack, bpack, dout


@jax.jit
def residual_block_fused(A_bf, X_bf, C_bf, CnT_bf, Wpack, bpack):
    return residual_block_pallas(A_bf, X_bf, C_bf, CnT_bf, Wpack, bpack)


def residual_block(X, edge_index, com_div, params1, params2, com_num):
    """X1 = gnn1(X); X2 = gnn2(X1); return X1 + X2 (all fused in one kernel)."""
    A, Xp, C, CnT, Wpack, bpack, dout = prepare_operands(
        X, edge_index, com_div, params1, params2, com_num)
    out_padded = residual_block_fused(A, Xp, C, CnT, Wpack, bpack)
    return out_padded[:, :dout]


# ----------------------------------- main ------------------------------------
if __name__ == "__main__":
    N, INPUT_DIM, OUTPUT_DIM, COM_NUM, E = 16, 8, 8, 4, 40

    key = jax.random.PRNGKey(0)
    kx, ke, kc, kp1, kp2 = jax.random.split(key, 5)

    X = jax.random.normal(kx, (N, INPUT_DIM), jnp.float32)
    edge_index = jax.random.randint(ke, (2, E), 0, N, dtype=jnp.int32)
    com_div = jax.random.randint(kc, (N,), 0, COM_NUM, dtype=jnp.int32)

    params1 = init_msgnn_params(kp1, INPUT_DIM, OUTPUT_DIM)   # gnn1
    params2 = init_msgnn_params(kp2, OUTPUT_DIM, OUTPUT_DIM)  # gnn2

    out = residual_block(X, edge_index, com_div, params1, params2, COM_NUM)
    jax.block_until_ready(out)

    assert out.shape == (N, OUTPUT_DIM) and out.dtype == jnp.float32
    print("KERNEL_OK")
</pallas_src>

<mosaic_0001>
module attributes {stable_mosaic.version = 11 : i64} {
  func.func @residual_block_kernel(%arg0: memref<16x16xbf16, #tpu.memory_space<vmem>>, %arg1: memref<16x128xbf16, #tpu.memory_space<vmem>>, %arg2: memref<16x128xbf16, #tpu.memory_space<vmem>>, %arg3: memref<128x16xbf16, #tpu.memory_space<vmem>>, %arg4: memref<4x128x128xbf16, #tpu.memory_space<vmem>>, %arg5: memref<2x128xf32, #tpu.memory_space<vmem>>, %arg6: memref<16x128xf32, #tpu.memory_space<vmem>>) attributes {dimension_semantics = [], scalar_prefetch = 0 : i64, scratch_operands = 0 : i64, tpu.core_type = #tpu.core_type<tc>} {
    %c0 = arith.constant 0 : index
    %c0_0 = arith.constant 0 : index
    %0 = vector.load %arg0[%c0, %c0_0] : memref<16x16xbf16, #tpu.memory_space<vmem>>, vector<16x16xbf16>
    %c0_1 = arith.constant 0 : index
    %c0_2 = arith.constant 0 : index
    %1 = vector.load %arg2[%c0_1, %c0_2] : memref<16x128xbf16, #tpu.memory_space<vmem>>, vector<16x128xbf16>
    %c0_3 = arith.constant 0 : index
    %c0_4 = arith.constant 0 : index
    %2 = vector.load %arg3[%c0_3, %c0_4] : memref<128x16xbf16, #tpu.memory_space<vmem>>, vector<128x16xbf16>
    %c0_5 = arith.constant 0 : index
    %c0_6 = arith.constant 0 : index
    %3 = vector.load %arg5[%c0_5, %c0_6] : memref<2x128xf32, #tpu.memory_space<vmem>>, vector<2x128xf32>
    %c0_7 = arith.constant 0 : index
    %c0_8 = arith.constant 0 : index
    %4 = vector.load %arg1[%c0_7, %c0_8] : memref<16x128xbf16, #tpu.memory_space<vmem>>, vector<16x128xbf16>
    %c0_9 = arith.constant 0 : index
    %c0_10 = arith.constant 0 : index
    %c0_11 = arith.constant 0 : index
    %5 = vector.load %arg4[%c0_9, %c0_10, %c0_11] : memref<4x128x128xbf16, #tpu.memory_space<vmem>>, vector<1x128x128xbf16>
    %6 = vector.shape_cast %5 : vector<1x128x128xbf16> to vector<128x128xbf16>
    %c1 = arith.constant 1 : index
    %c0_12 = arith.constant 0 : index
    %c0_13 = arith.constant 0 : index
    %7 = vector.load %arg4[%c1, %c0_12, %c0_13] : memref<4x128x128xbf16, #tpu.memory_space<vmem>>, vector<1x128x128xbf16>
    %8 = vector.shape_cast %7 : vector<1x128x128xbf16> to vector<128x128xbf16>
    %9 = vector.extract_strided_slice %3 {offsets = [0, 0], sizes = [1, 128], strides = [1, 1]} : vector<2x128xf32> to vector<1x128xf32>
    %cst = arith.constant dense<0.000000e+00> : vector<16x128xf32>
    %10 = tpu.matmul %0, %4, %cst {dimension_numbers = #tpu.dot_dimension_numbers<[1], [0], [0], [1], [0, 0, 1, 1], [], []>} : vector<16x16xbf16>, vector<16x128xbf16>, vector<16x128xf32> -> vector<16x128xf32>
    %cst_14 = arith.constant dense<0.000000e+00> : vector<128x128xf32>
    %11 = tpu.matmul %2, %4, %cst_14 {dimension_numbers = #tpu.dot_dimension_numbers<[1], [0], [0], [1], [0, 0, 1, 1], [], []>} : vector<128x16xbf16>, vector<16x128xbf16>, vector<128x128xf32> -> vector<128x128xf32>
    %12 = arith.truncf %11 : vector<128x128xf32> to vector<128x128xbf16>
    %cst_15 = arith.constant dense<0.000000e+00> : vector<128x128xf32>
    %13 = tpu.matmul %12, %8, %cst_15 {dimension_numbers = #tpu.dot_dimension_numbers<[1], [0], [0], [1], [0, 0, 1, 1], [], []>} : vector<128x128xbf16>, vector<128x128xbf16>, vector<128x128xf32> -> vector<128x128xf32>
    %14 = arith.truncf %10 : vector<16x128xf32> to vector<16x128xbf16>
    %cst_16 = arith.constant dense<0.000000e+00> : vector<16x128xf32>
    %15 = tpu.matmul %14, %6, %cst_16 {dimension_numbers = #tpu.dot_dimension_numbers<[1], [0], [0], [1], [0, 0, 1, 1], [], []>} : vector<16x128xbf16>, vector<128x128xbf16>, vector<16x128xf32> -> vector<16x128xf32>
    %16 = arith.truncf %13 : vector<128x128xf32> to vector<128x128xbf16>
    %cst_17 = arith.constant dense<0.000000e+00> : vector<16x128xf32>
    %17 = tpu.matmul %1, %16, %cst_17 {dimension_numbers = #tpu.dot_dimension_numbers<[1], [0], [0], [1], [0, 0, 1, 1], [], []>} : vector<16x128xbf16>, vector<128x128xbf16>, vector<16x128xf32> -> vector<16x128xf32>
    %18 = arith.addf %15, %17 : vector<16x128xf32>
    %19 = vector.broadcast %9 : vector<1x128xf32> to vector<16x128xf32>
    %20 = arith.addf %18, %19 : vector<16x128xf32>
    %cst_18 = arith.constant 0.000000e+00 : f32
    %21 = vector.broadcast %cst_18 : f32 to vector<16x128xf32>
    %22 = arith.maximumf %20, %21 : vector<16x128xf32>
    %23 = arith.truncf %22 : vector<16x128xf32> to vector<16x128xbf16>
    %c2 = arith.constant 2 : index
    %c0_19 = arith.constant 0 : index
    %c0_20 = arith.constant 0 : index
    %24 = vector.load %arg4[%c2, %c0_19, %c0_20] : memref<4x128x128xbf16, #tpu.memory_space<vmem>>, vector<1x128x128xbf16>
    %25 = vector.shape_cast %24 : vector<1x128x128xbf16> to vector<128x128xbf16>
    %c3 = arith.constant 3 : index
    %c0_21 = arith.constant 0 : index
    %c0_22 = arith.constant 0 : index
    %26 = vector.load %arg4[%c3, %c0_21, %c0_22] : memref<4x128x128xbf16, #tpu.memory_space<vmem>>, vector<1x128x128xbf16>
    %27 = vector.shape_cast %26 : vector<1x128x128xbf16> to vector<128x128xbf16>
    %28 = vector.extract_strided_slice %3 {offsets = [1, 0], sizes = [1, 128], strides = [1, 1]} : vector<2x128xf32> to vector<1x128xf32>
    %cst_23 = arith.constant dense<0.000000e+00> : vector<16x128xf32>
    %29 = tpu.matmul %0, %23, %cst_23 {dimension_numbers = #tpu.dot_dimension_numbers<[1], [0], [0], [1], [0, 0, 1, 1], [], []>} : vector<16x16xbf16>, vector<16x128xbf16>, vector<16x128xf32> -> vector<16x128xf32>
    %cst_24 = arith.constant dense<0.000000e+00> : vector<128x128xf32>
    %30 = tpu.matmul %2, %23, %cst_24 {dimension_numbers = #tpu.dot_dimension_numbers<[1], [0], [0], [1], [0, 0, 1, 1], [], []>} : vector<128x16xbf16>, vector<16x128xbf16>, vector<128x128xf32> -> vector<128x128xf32>
    %31 = arith.truncf %30 : vector<128x128xf32> to vector<128x128xbf16>
    %cst_25 = arith.constant dense<0.000000e+00> : vector<128x128xf32>
    %32 = tpu.matmul %31, %27, %cst_25 {dimension_numbers = #tpu.dot_dimension_numbers<[1], [0], [0], [1], [0, 0, 1, 1], [], []>} : vector<128x128xbf16>, vector<128x128xbf16>, vector<128x128xf32> -> vector<128x128xf32>
    %33 = arith.truncf %29 : vector<16x128xf32> to vector<16x128xbf16>
    %cst_26 = arith.constant dense<0.000000e+00> : vector<16x128xf32>
    %34 = tpu.matmul %33, %25, %cst_26 {dimension_numbers = #tpu.dot_dimension_numbers<[1], [0], [0], [1], [0, 0, 1, 1], [], []>} : vector<16x128xbf16>, vector<128x128xbf16>, vector<16x128xf32> -> vector<16x128xf32>
    %35 = arith.truncf %32 : vector<128x128xf32> to vector<128x128xbf16>
    %cst_27 = arith.constant dense<0.000000e+00> : vector<16x128xf32>
    %36 = tpu.matmul %1, %35, %cst_27 {dimension_numbers = #tpu.dot_dimension_numbers<[1], [0], [0], [1], [0, 0, 1, 1], [], []>} : vector<16x128xbf16>, vector<128x128xbf16>, vector<16x128xf32> -> vector<16x128xf32>
    %37 = arith.addf %34, %36 : vector<16x128xf32>
    %38 = vector.broadcast %28 : vector<1x128xf32> to vector<16x128xf32>
    %39 = arith.addf %37, %38 : vector<16x128xf32>
    %cst_28 = arith.constant 0.000000e+00 : f32
    %40 = vector.broadcast %cst_28 : f32 to vector<16x128xf32>
    %41 = arith.maximumf %39, %40 : vector<16x128xf32>
    %42 = arith.addf %22, %41 : vector<16x128xf32>
    %c0_29 = arith.constant 0 : index
    %c0_30 = arith.constant 0 : index
    %43 = vector.load %arg6[%c0_29, %c0_30] : memref<16x128xf32, #tpu.memory_space<vmem>>, vector<16x128xf32>
    tpu.vector_store %arg6[%c0_29, %c0_30], %42 {strides = array<i32>} : memref<16x128xf32, #tpu.memory_space<vmem>>, vector<16x128xf32>,
    return
  }
}

</mosaic_0001>

<llo_original>
// kernel: residual_block_fused.1
$region0: #{residual_block_fused.1}
  #allocation0 [shape = 'u32[]', space=smem, size = 0x4, offset = 0x4, fixed_abs, tag = 'smem constant byte address 0x4 - core index']
  #allocation1 [shape = 'u32[72,128]{1,0:T(1,128)}', space=vmem, size = 0x9000, scoped, tag = 'internal scratch']
  %s0 = inlined_call_operand.vmem [shape: bf16[16,16], index: 0, kind: input, shape index: {}]
  %s1 = inlined_call_operand.vmem [shape: bf16[16,128], index: 1, kind: input, shape index: {}]
  %s2 = inlined_call_operand.vmem [shape: bf16[16,128], index: 2, kind: input, shape index: {}]
  %s3 = inlined_call_operand.vmem [shape: bf16[128,16], index: 3, kind: input, shape index: {}]
  %s4 = inlined_call_operand.hbm [shape: bf16[4,128,128], index: 4, kind: input, shape index: {}]
  %s5 = inlined_call_operand.vmem [shape: f32[2,128], index: 5, kind: input, shape index: {}]
  %s6 = inlined_call_operand.hbm [shape: f32[16,128], index: 6, kind: output, shape index: {}]
  %s7 = sld [smem:[#allocation0]]
  $region38: #{residual_block_fused.1} parent=0
    _
  %s9 = ssub.s32 1, %s7
  %s10 = scalar_select 0, %s9, %s7
  $region1: #{residual_block_fused.1} parent=0
    #allocation2 [shape = 'u8[131072]{0}', space=vmem, size = 0x20000, scoped, tag = 'input window, operand 4, single buffered']
    #allocation3 [shape = 's32[1]{0}', space=sflag, size = 0x4, scoped, tag = 'scoped memory for residual_block_fused.1']
    #allocation4 [shape = 's32[1]{0}', space=sflag, size = 0x4, scoped, tag = 'scoped memory for residual_block_fused.1']
    #allocation5 [shape = 'u8[8192]{0}', space=vmem, size = 0x2000, scoped, tag = 'output window, operand 0, single buffered']
    %11 = vsyncpa [#allocation3], 0
    %12 = vsyncpa [#allocation4], 0
    // Predicated region
    $region2: #{residual_block_fused.1} parent=1 // pred_check
      _
    $region3: #{residual_block_fused.1} parent=1 // pred_check_branch
      %14 = sbr.rel (0) target = $region5
    $region4: #{residual_block_fused.1} parent=1 // pred_region
      _
    $region5: #{residual_block_fused.1} parent=1 // pred_fallthru
      _
    // Predicated region
    $region6: #{residual_block_fused.1} parent=1 // pred_check
      _
    $region7: #{residual_block_fused.1} parent=1 // pred_check_branch
      %16 = sbr.rel (0) target = $region9
    $region8: #{residual_block_fused.1} parent=1 // pred_region
      _
    $region9: #{residual_block_fused.1} parent=1 // pred_fallthru
      _
    // Predicated region
    $region10: #{residual_block_fused.1} parent=1 // pred_check
      _
    $region11: #{residual_block_fused.1} parent=1 // pred_check_branch
      %18 = sbr.rel (0) target = $region13
    $region12: #{residual_block_fused.1} parent=1 // pred_region
      _
    $region13: #{residual_block_fused.1} parent=1 // pred_fallthru
      _
    // Predicated region
    $region14: #{residual_block_fused.1} parent=1 // pred_check
      _
    $region15: #{residual_block_fused.1} parent=1 // pred_check_branch
      %20 = sbr.rel (0) target = $region17
    $region16: #{residual_block_fused.1} parent=1 // pred_region
      _
    $region17: #{residual_block_fused.1} parent=1 // pred_fallthru
      _
    // Predicated region
    $region18: #{residual_block_fused.1} parent=1 // pred_check
      _
    $region19: #{residual_block_fused.1} parent=1 // pred_check_branch
      %22 = sbr.rel (0) target = $region21
    $region20: #{residual_block_fused.1} parent=1 // pred_region
      %24 = vsyncadd [#allocation3], 0
      %s25 = sshll.u32 %s4, 4
      %s26 = int_to_ptr.hbm [resolvable:$true] %s25
      %s27 = sshll.u32 [#allocation2], 4
      %s28 = int_to_ptr.vmem [resolvable:$true] %s27
      %33 = dma.hbm_to_vmem [thread:$0]  %s26, 4096, %s28, [#allocation3], 64, 64, 4
    $region21: #{residual_block_fused.1} parent=1 // pred_fallthru
      _
    // Predicated region
    $region22: #{residual_block_fused.1} parent=1 // pred_check
      _
    $region23: #{residual_block_fused.1} parent=1 // pred_check_branch
      %35 = sbr.rel (0) target = $region25
    $region24: #{residual_block_fused.1} parent=1 // pred_region
      _
    $region25: #{residual_block_fused.1} parent=1 // pred_fallthru
      _
    // Predicated region
    $region26: #{residual_block_fused.1} parent=1 // pred_check
      _
    $region27: #{residual_block_fused.1} parent=1 // pred_check_branch
      %37 = sbr.rel (0) target = $region29
    $region28: #{residual_block_fused.1} parent=1 // pred_region
      %39 = dma.done [#allocation3], 4096
    $region29: #{residual_block_fused.1} parent=1 // pred_fallthru
      _
    %v41 = vld [vmem:[%s0] sm:$0xf]
    %v42 = vld [vmem:[%s0 + $0x4] sm:$0xf]
    %v43 = vld [vmem:[%s2] sm:$0xf]
    %v44 = vld [vmem:[%s2 + $0x4] sm:$0xf]
    %v45 = vld [vmem:[%s3] sm:$0xf]
    %v46 = vld [vmem:[%s3 + $0x4] sm:$0xf]
    %v47 = vld [vmem:[%s3 + $0x8] sm:$0xf]
    %v48 = vld [vmem:[%s3 + $0xc] sm:$0xf]
    %v49 = vld [vmem:[%s3 + $0x10] sm:$0xf]
    %v50 = vld [vmem:[%s3 + $0x14] sm:$0xf]
    %v51 = vld [vmem:[%s3 + $0x18] sm:$0xf]
    %v52 = vld [vmem:[%s3 + $0x1c] sm:$0xf]
    %v53 = vld [vmem:[%s3 + $0x20] sm:$0xf]
    %v54 = vld [vmem:[%s3 + $0x24] sm:$0xf]
    %v55 = vld [vmem:[%s3 + $0x28] sm:$0xf]
    %v56 = vld [vmem:[%s3 + $0x2c] sm:$0xf]
    %v57 = vld [vmem:[%s3 + $0x30] sm:$0xf]
    %v58 = vld [vmem:[%s3 + $0x34] sm:$0xf]
    %v59 = vld [vmem:[%s3 + $0x38] sm:$0xf]
    %v60 = vld [vmem:[%s3 + $0x3c] sm:$0xf]
    %v61 = vld [vmem:[%s5] sm:$0x3]
    %v62 = vld [vmem:[%s1] sm:$0xf]
    %v63 = vld [vmem:[%s1 + $0x4] sm:$0xf]
    %v64 = vld [vmem:[#allocation2] sm:$0xf]
    %v65 = vld [vmem:[#allocation2 + $0x4] sm:$0xf]
    %v66 = vld [vmem:[#allocation2 + $0x8] sm:$0xf]
    %v67 = vld [vmem:[#allocation2 + $0xc] sm:$0xf]
    %v68 = vld [vmem:[#allocation2 + $0x10] sm:$0xf]
    %v69 = vld [vmem:[#allocation2 + $0x14] sm:$0xf]
    %v70 = vld [vmem:[#allocation2 + $0x18] sm:$0xf]
    %v71 = vld [vmem:[#allocation2 + $0x1c] sm:$0xf]
    %v72 = vld [vmem:[#allocation2 + $0x20] sm:$0xf]
    %v73 = vld [vmem:[#allocation2 + $0x24] sm:$0xf]
    %v74 = vld [vmem:[#allocation2 + $0x28] sm:$0xf]
    %v75 = vld [vmem:[#allocation2 + $0x2c] sm:$0xf]
    %v76 = vld [vmem:[#allocation2 + $0x30] sm:$0xf]
    %v77 = vld [vmem:[#allocation2 + $0x34] sm:$0xf]
    %v78 = vld [vmem:[#allocation2 + $0x38] sm:$0xf]
    %v79 = vld [vmem:[#allocation2 + $0x3c] sm:$0xf]
    %s80 = scalar_lea.vmem [#allocation2], 64
    %v81 = vld [vmem:[%s80] sm:$0xf]
    %v82 = vld [vmem:[%s80 + $0x4] sm:$0xf]
    %v83 = vld [vmem:[%s80 + $0x8] sm:$0xf]
    %v84 = vld [vmem:[%s80 + $0xc] sm:$0xf]
    %v85 = vld [vmem:[%s80 + $0x10] sm:$0xf]
    %v86 = vld [vmem:[%s80 + $0x14] sm:$0xf]
    %v87 = vld [vmem:[%s80 + $0x18] sm:$0xf]
    %v88 = vld [vmem:[%s80 + $0x1c] sm:$0xf]
    %v89 = vld [vmem:[%s80 + $0x20] sm:$0xf]
    %v90 = vld [vmem:[%s80 + $0x24] sm:$0xf]
    %v91 = vld [vmem:[%s80 + $0x28] sm:$0xf]
    %v92 = vld [vmem:[%s80 + $0x2c] sm:$0xf]
    %v93 = vld [vmem:[%s80 + $0x30] sm:$0xf]
    %v94 = vld [vmem:[%s80 + $0x34] sm:$0xf]
    %v95 = vld [vmem:[%s80 + $0x38] sm:$0xf]
    %v96 = vld [vmem:[%s80 + $0x3c] sm:$0xf]
    %v99 = vunpack.c.l.b16 %v41
    %v100 = vunpack.c.l.b16 %v42
    %v101 = vpack.c.b16 %v100, %v99
    %v104 = vunpack.c.l.b16 %v62
    %v105 = vunpack.c.l.b16 %v63
    %v106 = vpack.c.b16 %v105, %v104
    %vm108 = vcmask 130048
    %v110 = vsel %vm108, %v101, 0
    %112 = vmatpush.bf16.msra.mxu0 0
    %113 = vmatpush.bf16.msra.mxu0 0
    %114 = vmatpush.bf16.msra.mxu0 0
    %115 = vmatpush.bf16.msra.mxu0 0
    %116 = vmatpush.bf16.msra.mxu0 0
    %117 = vmatpush.bf16.msra.mxu0 0
    %118 = vmatpush.bf16.msra.mxu0 0
    %119 = vmatpush.bf16.msra.mxu0 %v106
    %120 = vmatmul.bf16.gmra.mxu0 %v110
    %v121 = vpop.f32.mrf.mxu0
    %v122 = vadd.f32 0.0, %v121
    %v123 = vpop.f32.mrf.mxu0
    %v124 = vadd.f32 0.0, %v123
    %125 = vdwg.mxu0
    %v142 = vunpack.c.l.b16 %v45
    %v143 = vunpack.c.l.b16 %v46
    %v144 = vunpack.c.l.b16 %v47
    %v145 = vunpack.c.l.b16 %v48
    %v146 = vunpack.c.l.b16 %v49
    %v147 = vunpack.c.l.b16 %v50
    %v148 = vunpack.c.l.b16 %v51
    %v149 = vunpack.c.l.b16 %v52
    %v150 = vunpack.c.l.b16 %v53
    %v151 = vunpack.c.l.b16 %v54
    %v152 = vunpack.c.l.b16 %v55
    %v153 = vunpack.c.l.b16 %v56
    %v154 = vunpack.c.l.b16 %v57
    %v155 = vunpack.c.l.b16 %v58
    %v156 = vunpack.c.l.b16 %v59
    %v157 = vunpack.c.l.b16 %v60
    %v158 = vpack.c.b16 %v143, %v142
    %v159 = vpack.c.b16 %v145, %v144
    %v160 = vpack.c.b16 %v147, %v146
    %v161 = vpack.c.b16 %v149, %v148
    %v162 = vpack.c.b16 %v151, %v150
    %v163 = vpack.c.b16 %v153, %v152
    %v164 = vpack.c.b16 %v155, %v154
    %v165 = vpack.c.b16 %v157, %v156
    %v167 = vsel %vm108, %v158, 0
    %v170 = vsel %vm108, %v159, 0
    %v173 = vsel %vm108, %v160, 0
    %v176 = vsel %vm108, %v161, 0
    %v179 = vsel %vm108, %v162, 0
    %v182 = vsel %vm108, %v163, 0
    %v185 = vsel %vm108, %v164, 0
    %v188 = vsel %vm108, %v165, 0
    %190 = vmatpush.bf16.msra.mxu0 0
    %191 = vmatpush.bf16.msra.mxu0 0
    %192 = vmatpush.bf16.msra.mxu0 0
    %193 = vmatpush.bf16.msra.mxu0 0
    %194 = vmatpush.bf16.msra.mxu0 0
    %195 = vmatpush.bf16.msra.mxu0 0
    %196 = vmatpush.bf16.msra.mxu0 0
    %197 = vmatpush.bf16.msra.mxu0 %v106
    %198 = vmatmul.bf16.gmra.mxu0 %v167
    %v199 = vpop.f32.mrf.mxu0
    %v200 = vadd.f32 0.0, %v199
    %v201 = vpop.f32.mrf.mxu0
    %v202 = vadd.f32 0.0, %v201
    %203 = vmatmul.bf16.gmra.mxu0 %v170
    %v204 = vpop.f32.mrf.mxu0
    %v205 = vadd.f32 0.0, %v204
    %v206 = vpop.f32.mrf.mxu0
    %v207 = vadd.f32 0.0, %v206
    %208 = vmatmul.bf16.gmra.mxu0 %v173
    %v209 = vpop.f32.mrf.mxu0
    %v210 = vadd.f32 0.0, %v209
    %v211 = vpop.f32.mrf.mxu0
    %v212 = vadd.f32 0.0, %v211
    %213 = vmatmul.bf16.gmra.mxu0 %v176
    %v214 = vpop.f32.mrf.mxu0
    %v215 = vadd.f32 0.0, %v214
    %v216 = vpop.f32.mrf.mxu0
    %v217 = vadd.f32 0.0, %v216
    %218 = vmatmul.bf16.gmra.mxu0 %v179
    %v219 = vpop.f32.mrf.mxu0
    %v220 = vadd.f32 0.0, %v219
    %v221 = vpop.f32.mrf.mxu0
    %v222 = vadd.f32 0.0, %v221
    %223 = vmatmul.bf16.gmra.mxu0 %v182
    %v224 = vpop.f32.mrf.mxu0
    %v225 = vadd.f32 0.0, %v224
    %v226 = vpop.f32.mrf.mxu0
    %v227 = vadd.f32 0.0, %v226
    %228 = vmatmul.bf16.gmra.mxu0 %v185
    %v229 = vpop.f32.mrf.mxu0
    %v230 = vadd.f32 0.0, %v229
    %v231 = vpop.f32.mrf.mxu0
    %v232 = vadd.f32 0.0, %v231
    %233 = vmatmul.bf16.gmra.mxu0 %v188
    %v234 = vpop.f32.mrf.mxu0
    %v235 = vadd.f32 0.0, %v234
    %v236 = vpop.f32.mrf.mxu0
    %v237 = vadd.f32 0.0, %v236
    %238 = vdwg.mxu0
    %v239 = vpack.c.bf16 %v202, %v200
    %v240 = vpack.c.bf16 %v207, %v205
    %v241 = vpack.c.bf16 %v212, %v210
    %v242 = vpack.c.bf16 %v217, %v215
    %v243 = vpack.c.bf16 %v222, %v220
    %v244 = vpack.c.bf16 %v227, %v225
    %v245 = vpack.c.bf16 %v232, %v230
    %v246 = vpack.c.bf16 %v237, %v235
    %v263 = vunpack.c.l.b16 %v81
    %v264 = vunpack.c.l.b16 %v82
    %v265 = vunpack.c.l.b16 %v83
    %v266 = vunpack.c.l.b16 %v84
    %v267 = vunpack.c.l.b16 %v85
    %v268 = vunpack.c.l.b16 %v86
    %v269 = vunpack.c.l.b16 %v87
    %v270 = vunpack.c.l.b16 %v88
    %v271 = vunpack.c.l.b16 %v89
    %v272 = vunpack.c.l.b16 %v90
    %v273 = vunpack.c.l.b16 %v91
    %v274 = vunpack.c.l.b16 %v92
    %v275 = vunpack.c.l.b16 %v93
    %v276 = vunpack.c.l.b16 %v94
    %v277 = vunpack.c.l.b16 %v95
    %v278 = vunpack.c.l.b16 %v96
    %v279 = vpack.c.b16 %v264, %v263
    %v280 = vpack.c.b16 %v266, %v265
    %v281 = vpack.c.b16 %v268, %v267
    %v282 = vpack.c.b16 %v270, %v269
    %v283 = vpack.c.b16 %v272, %v271
    %v284 = vpack.c.b16 %v274, %v273
    %v285 = vpack.c.b16 %v276, %v275
    %v286 = vpack.c.b16 %v278, %v277
    %295 = vmatpush.bf16.msra.mxu0 %v286
    %296 = vmatpush.bf16.msra.mxu0 %v285
    %297 = vmatpush.bf16.msra.mxu0 %v284
    %298 = vmatpush.bf16.msra.mxu0 %v283
    %299 = vmatpush.bf16.msra.mxu0 %v282
    %300 = vmatpush.bf16.msra.mxu0 %v281
    %301 = vmatpush.bf16.msra.mxu0 %v280
    %302 = vmatpush.bf16.msra.mxu0 %v279
    %303 = vmatmul.bf16.gmra.mxu0 %v239
    %v304 = vpop.f32.mrf.mxu0
    %v305 = vadd.f32 0.0, %v304
    %v306 = vpop.f32.mrf.mxu0
    %v307 = vadd.f32 0.0, %v306
    %308 = vmatmul.bf16.gmra.mxu0 %v240
    %v309 = vpop.f32.mrf.mxu0
    %v310 = vadd.f32 0.0, %v309
    %v311 = vpop.f32.mrf.mxu0
    %v312 = vadd.f32 0.0, %v311
    %313 = vmatmul.bf16.gmra.mxu0 %v241
    %v314 = vpop.f32.mrf.mxu0
    %v315 = vadd.f32 0.0, %v314
    %v316 = vpop.f32.mrf.mxu0
    %v317 = vadd.f32 0.0, %v316
    %318 = vmatmul.bf16.gmra.mxu0 %v242
    %v319 = vpop.f32.mrf.mxu0
    %v320 = vadd.f32 0.0, %v319
    %v321 = vpop.f32.mrf.mxu0
    %v322 = vadd.f32 0.0, %v321
    %323 = vmatmul.bf16.gmra.mxu0 %v243
    %v324 = vpop.f32.mrf.mxu0
    %v325 = vadd.f32 0.0, %v324
    %v326 = vpop.f32.mrf.mxu0
    %v327 = vadd.f32 0.0, %v326
    %328 = vmatmul.bf16.gmra.mxu0 %v244
    %v329 = vpop.f32.mrf.mxu0
    %v330 = vadd.f32 0.0, %v329
    %v331 = vpop.f32.mrf.mxu0
    %v332 = vadd.f32 0.0, %v331
    %333 = vmatmul.bf16.gmra.mxu0 %v245
    %v334 = vpop.f32.mrf.mxu0
    %v335 = vadd.f32 0.0, %v334
    %v336 = vpop.f32.mrf.mxu0
    %v337 = vadd.f32 0.0, %v336
    %338 = vmatmul.bf16.gmra.mxu0 %v246
    %v339 = vpop.f32.mrf.mxu0
    %v340 = vadd.f32 0.0, %v339
    %v341 = vpop.f32.mrf.mxu0
    %v342 = vadd.f32 0.0, %v341
    %343 = vdwg.mxu0
    %v344 = vpack.c.bf16 %v124, %v122
    %v345 = vpack.c.bf16 %v307, %v305
    %v346 = vpack.c.bf16 %v312, %v310
    %v347 = vpack.c.bf16 %v317, %v315
    %v348 = vpack.c.bf16 %v322, %v320
    %v349 = vpack.c.bf16 %v327, %v325
    %v350 = vpack.c.bf16 %v332, %v330
    %v351 = vpack.c.bf16 %v337, %v335
    %v352 = vpack.c.bf16 %v342, %v340
    %v355 = vunpack.c.l.b16 %v43
    %v356 = vunpack.c.l.b16 %v44
    %v357 = vpack.c.b16 %v356, %v355
    %359 = vmatpush.bf16.msra.mxu0 %v352
    %360 = vmatpush.bf16.msra.mxu0 %v351
    %361 = vmatpush.bf16.msra.mxu0 %v350
    %362 = vmatpush.bf16.msra.mxu0 %v349
    %363 = vmatpush.bf16.msra.mxu0 %v348
    %364 = vmatpush.bf16.msra.mxu0 %v347
    %365 = vmatpush.bf16.msra.mxu0 %v346
    %366 = vmatpush.bf16.msra.mxu0 %v345
    %367 = vmatmul.bf16.gmra.mxu0 %v357
    %v368 = vpop.f32.mrf.mxu0
    %v369 = vadd.f32 0.0, %v368
    %v370 = vpop.f32.mrf.mxu0
    %v371 = vadd.f32 0.0, %v370
    %372 = vdwg.mxu0
    %v389 = vunpack.c.l.b16 %v64
    %v390 = vunpack.c.l.b16 %v65
    %v391 = vunpack.c.l.b16 %v66
    %v392 = vunpack.c.l.b16 %v67
    %v393 = vunpack.c.l.b16 %v68
    %v394 = vunpack.c.l.b16 %v69
    %v395 = vunpack.c.l.b16 %v70
    %v396 = vunpack.c.l.b16 %v71
    %v397 = vunpack.c.l.b16 %v72
    %v398 = vunpack.c.l.b16 %v73
    %v399 = vunpack.c.l.b16 %v74
    %v400 = vunpack.c.l.b16 %v75
    %v401 = vunpack.c.l.b16 %v76
    %v402 = vunpack.c.l.b16 %v77
    %v403 = vunpack.c.l.b16 %v78
    %v404 = vunpack.c.l.b16 %v79
    %v405 = vpack.c.b16 %v390, %v389
    %v406 = vpack.c.b16 %v392, %v391
    %v407 = vpack.c.b16 %v394, %v393
    %v408 = vpack.c.b16 %v396, %v395
    %v409 = vpack.c.b16 %v398, %v397
    %v410 = vpack.c.b16 %v400, %v399
    %v411 = vpack.c.b16 %v402, %v401
    %v412 = vpack.c.b16 %v404, %v403
    %421 = vmatpush.bf16.msra.mxu0 %v412
    %422 = vmatpush.bf16.msra.mxu0 %v411
    %423 = vmatpush.bf16.msra.mxu0 %v410
    %424 = vmatpush.bf16.msra.mxu0 %v409
    %425 = vmatpush.bf16.msra.mxu0 %v408
    %426 = vmatpush.bf16.msra.mxu0 %v407
    %427 = vmatpush.bf16.msra.mxu0 %v406
    %428 = vmatpush.bf16.msra.mxu0 %v405
    %429 = vmatmul.bf16.gmra.mxu0 %v344
    %v430 = vpop.f32.mrf.mxu0
    %v431 = vadd.f32 %v369, %v430
    %v432 = vpop.f32.mrf.mxu0
    %v433 = vadd.f32 %v371, %v432
    %434 = vdwg.mxu0
    %v435 = vperm.slane %v61, 0
    %v436 = vadd.f32 %v431, %v435
    %v437 = vadd.f32 %v433, %v435
    %v438 = vmax.f32 %v436, 0.0
    %v439 = vmax.f32 %v437, 0.0
    %v440 = vpack.c.bf16 %v439, %v438
    %s441 = scalar_lea.vmem [#allocation2], 128
    %v442 = vld [vmem:[%s441] sm:$0xf]
    %v443 = vld [vmem:[%s441 + $0x4] sm:$0xf]
    %v444 = vld [vmem:[%s441 + $0x8] sm:$0xf]
    %v445 = vld [vmem:[%s441 + $0xc] sm:$0xf]
    %v446 = vld [vmem:[%s441 + $0x10] sm:$0xf]
    %v447 = vld [vmem:[%s441 + $0x14] sm:$0xf]
    %v448 = vld [vmem:[%s441 + $0x18] sm:$0xf]
    %v449 = vld [vmem:[%s441 + $0x1c] sm:$0xf]
    %v450 = vld [vmem:[%s441 + $0x20] sm:$0xf]
    %v451 = vld [vmem:[%s441 + $0x24] sm:$0xf]
    %v452 = vld [vmem:[%s441 + $0x28] sm:$0xf]
    %v453 = vld [vmem:[%s441 + $0x2c] sm:$0xf]
    %v454 = vld [vmem:[%s441 + $0x30] sm:$0xf]
    %v455 = vld [vmem:[%s441 + $0x34] sm:$0xf]
    %v456 = vld [vmem:[%s441 + $0x38] sm:$0xf]
    %v457 = vld [vmem:[%s441 + $0x3c] sm:$0xf]
    %s458 = scalar_lea.vmem [#allocation2], 192
    %v459 = vld [vmem:[%s458] sm:$0xf]
    %v460 = vld [vmem:[%s458 + $0x4] sm:$0xf]
    %v461 = vld [vmem:[%s458 + $0x8] sm:$0xf]
    %v462 = vld [vmem:[%s458 + $0xc] sm:$0xf]
    %v463 = vld [vmem:[%s458 + $0x10] sm:$0xf]
    %v464 = vld [vmem:[%s458 + $0x14] sm:$0xf]
    %v465 = vld [vmem:[%s458 + $0x18] sm:$0xf]
    %v466 = vld [vmem:[%s458 + $0x1c] sm:$0xf]
    %v467 = vld [vmem:[%s458 + $0x20] sm:$0xf]
    %v468 = vld [vmem:[%s458 + $0x24] sm:$0xf]
    %v469 = vld [vmem:[%s458 + $0x28] sm:$0xf]
    %v470 = vld [vmem:[%s458 + $0x2c] sm:$0xf]
    %v471 = vld [vmem:[%s458 + $0x30] sm:$0xf]
    %v472 = vld [vmem:[%s458 + $0x34] sm:$0xf]
    %v473 = vld [vmem:[%s458 + $0x38] sm:$0xf]
    %v474 = vld [vmem:[%s458 + $0x3c] sm:$0xf]
    %475 = vmatpush.bf16.msra.mxu0 0
    %476 = vmatpush.bf16.msra.mxu0 0
    %477 = vmatpush.bf16.msra.mxu0 0
    %478 = vmatpush.bf16.msra.mxu0 0
    %479 = vmatpush.bf16.msra.mxu0 0
    %480 = vmatpush.bf16.msra.mxu0 0
    %481 = vmatpush.bf16.msra.mxu0 0
    %482 = vmatpush.bf16.msra.mxu0 %v440
    %483 = vmatmul.bf16.gmra.mxu0 %v110
    %v484 = vpop.f32.mrf.mxu0
    %v485 = vadd.f32 0.0, %v484
    %v486 = vpop.f32.mrf.mxu0
    %v487 = vadd.f32 0.0, %v486
    %488 = vdwg.mxu0
    %489 = vmatpush.bf16.msra.mxu0 0
    %490 = vmatpush.bf16.msra.mxu0 0
    %491 = vmatpush.bf16.msra.mxu0 0
    %492 = vmatpush.bf16.msra.mxu0 0
    %493 = vmatpush.bf16.msra.mxu0 0
    %494 = vmatpush.bf16.msra.mxu0 0
    %495 = vmatpush.bf16.msra.mxu0 0
    %496 = vmatpush.bf16.msra.mxu0 %v440
    %497 = vmatmul.bf16.gmra.mxu0 %v167
    %v498 = vpop.f32.mrf.mxu0
    %v499 = vadd.f32 0.0, %v498
    %v500 = vpop.f32.mrf.mxu0
    %v501 = vadd.f32 0.0, %v500
    %502 = vmatmul.bf16.gmra.mxu0 %v170
    %v503 = vpop.f32.mrf.mxu0
    %v504 = vadd.f32 0.0, %v503
    %v505 = vpop.f32.mrf.mxu0
    %v506 = vadd.f32 0.0, %v505
    %507 = vmatmul.bf16.gmra.mxu0 %v173
    %v508 = vpop.f32.mrf.mxu0
    %v509 = vadd.f32 0.0, %v508
    %v510 = vpop.f32.mrf.mxu0
    %v511 = vadd.f32 0.0, %v510
    %512 = vmatmul.bf16.gmra.mxu0 %v176
    %v513 = vpop.f32.mrf.mxu0
    %v514 = vadd.f32 0.0, %v513
    %v515 = vpop.f32.mrf.mxu0
    %v516 = vadd.f32 0.0, %v515
    %517 = vmatmul.bf16.gmra.mxu0 %v179
    %v518 = vpop.f32.mrf.mxu0
    %v519 = vadd.f32 0.0, %v518
    %v520 = vpop.f32.mrf.mxu0
    %v521 = vadd.f32 0.0, %v520
    %522 = vmatmul.bf16.gmra.mxu0 %v182
    %v523 = vpop.f32.mrf.mxu0
    %v524 = vadd.f32 0.0, %v523
    %v525 = vpop.f32.mrf.mxu0
    %v526 = vadd.f32 0.0, %v525
    %527 = vmatmul.bf16.gmra.mxu0 %v185
    %v528 = vpop.f32.mrf.mxu0
    %v529 = vadd.f32 0.0, %v528
    %v530 = vpop.f32.mrf.mxu0
    %v531 = vadd.f32 0.0, %v530
    %532 = vmatmul.bf16.gmra.mxu0 %v188
    %v533 = vpop.f32.mrf.mxu0
    %v534 = vadd.f32 0.0, %v533
    %v535 = vpop.f32.mrf.mxu0
    %v536 = vadd.f32 0.0, %v535
    %537 = vdwg.mxu0
    %v538 = vpack.c.bf16 %v501, %v499
    %v539 = vpack.c.bf16 %v506, %v504
    %v540 = vpack.c.bf16 %v511, %v509
    %v541 = vpack.c.bf16 %v516, %v514
    %v542 = vpack.c.bf16 %v521, %v519
    %v543 = vpack.c.bf16 %v526, %v524
    %v544 = vpack.c.bf16 %v531, %v529
    %v545 = vpack.c.bf16 %v536, %v534
    %v562 = vunpack.c.l.b16 %v459
    %v563 = vunpack.c.l.b16 %v460
    %v564 = vunpack.c.l.b16 %v461
    %v565 = vunpack.c.l.b16 %v462
    %v566 = vunpack.c.l.b16 %v463
    %v567 = vunpack.c.l.b16 %v464
    %v568 = vunpack.c.l.b16 %v465
    %v569 = vunpack.c.l.b16 %v466
    %v570 = vunpack.c.l.b16 %v467
    %v571 = vunpack.c.l.b16 %v468
    %v572 = vunpack.c.l.b16 %v469
    %v573 = vunpack.c.l.b16 %v470
    %v574 = vunpack.c.l.b16 %v471
    %v575 = vunpack.c.l.b16 %v472
    %v576 = vunpack.c.l.b16 %v473
    %v577 = vunpack.c.l.b16 %v474
    %v578 = vpack.c.b16 %v563, %v562
    %v579 = vpack.c.b16 %v565, %v564
    %v580 = vpack.c.b16 %v567, %v566
    %v581 = vpack.c.b16 %v569, %v568
    %v582 = vpack.c.b16 %v571, %v570
    %v583 = vpack.c.b16 %v573, %v572
    %v584 = vpack.c.b16 %v575, %v574
    %v585 = vpack.c.b16 %v577, %v576
    %594 = vmatpush.bf16.msra.mxu0 %v585
    %595 = vmatpush.bf16.msra.mxu0 %v584
    %596 = vmatpush.bf16.msra.mxu0 %v583
    %597 = vmatpush.bf16.msra.mxu0 %v582
    %598 = vmatpush.bf16.msra.mxu0 %v581
    %599 = vmatpush.bf16.msra.mxu0 %v580
    %600 = vmatpush.bf16.msra.mxu0 %v579
    %601 = vmatpush.bf16.msra.mxu0 %v578
    %602 = vmatmul.bf16.gmra.mxu0 %v538
    %v603 = vpop.f32.mrf.mxu0
    %v604 = vadd.f32 0.0, %v603
    %v605 = vpop.f32.mrf.mxu0
    %v606 = vadd.f32 0.0, %v605
    %607 = vmatmul.bf16.gmra.mxu0 %v539
    %v608 = vpop.f32.mrf.mxu0
    %v609 = vadd.f32 0.0, %v608
    %v610 = vpop.f32.mrf.mxu0
    %v611 = vadd.f32 0.0, %v610
    %612 = vmatmul.bf16.gmra.mxu0 %v540
    %v613 = vpop.f32.mrf.mxu0
    %v614 = vadd.f32 0.0, %v613
    %v615 = vpop.f32.mrf.mxu0
    %v616 = vadd.f32 0.0, %v615
    %617 = vmatmul.bf16.gmra.mxu0 %v541
    %v618 = vpop.f32.mrf.mxu0
    %v619 = vadd.f32 0.0, %v618
    %v620 = vpop.f32.mrf.mxu0
    %v621 = vadd.f32 0.0, %v620
    %622 = vmatmul.bf16.gmra.mxu0 %v542
    %v623 = vpop.f32.mrf.mxu0
    %v624 = vadd.f32 0.0, %v623
    %v625 = vpop.f32.mrf.mxu0
    %v626 = vadd.f32 0.0, %v625
    %627 = vmatmul.bf16.gmra.mxu0 %v543
    %v628 = vpop.f32.mrf.mxu0
    %v629 = vadd.f32 0.0, %v628
    %v630 = vpop.f32.mrf.mxu0
    %v631 = vadd.f32 0.0, %v630
    %632 = vmatmul.bf16.gmra.mxu0 %v544
    %v633 = vpop.f32.mrf.mxu0
    %v634 = vadd.f32 0.0, %v633
    %v635 = vpop.f32.mrf.mxu0
    %v636 = vadd.f32 0.0, %v635
    %637 = vmatmul.bf16.gmra.mxu0 %v545
    %v638 = vpop.f32.mrf.mxu0
    %v639 = vadd.f32 0.0, %v638
    %v640 = vpop.f32.mrf.mxu0
    %v641 = vadd.f32 0.0, %v640
    %642 = vdwg.mxu0
    %v643 = vpack.c.bf16 %v487, %v485
    %v644 = vpack.c.bf16 %v606, %v604
    %v645 = vpack.c.bf16 %v611, %v609
    %v646 = vpack.c.bf16 %v616, %v614
    %v647 = vpack.c.bf16 %v621, %v619
    %v648 = vpack.c.bf16 %v626, %v624
    %v649 = vpack.c.bf16 %v631, %v629
    %v650 = vpack.c.bf16 %v636, %v634
    %v651 = vpack.c.bf16 %v641, %v639
    %652 = vmatpush.bf16.msra.mxu0 %v651
    %653 = vmatpush.bf16.msra.mxu0 %v650
    %654 = vmatpush.bf16.msra.mxu0 %v649
    %655 = vmatpush.bf16.msra.mxu0 %v648
    %656 = vmatpush.bf16.msra.mxu0 %v647
    %657 = vmatpush.bf16.msra.mxu0 %v646
    %658 = vmatpush.bf16.msra.mxu0 %v645
    %659 = vmatpush.bf16.msra.mxu0 %v644
    %660 = vmatmul.bf16.gmra.mxu0 %v357
    %v661 = vpop.f32.mrf.mxu0
    %v662 = vadd.f32 0.0, %v661
    %v663 = vpop.f32.mrf.mxu0
    %v664 = vadd.f32 0.0, %v663
    %665 = vdwg.mxu0
    %v682 = vunpack.c.l.b16 %v442
    %v683 = vunpack.c.l.b16 %v443
    %v684 = vunpack.c.l.b16 %v444
    %v685 = vunpack.c.l.b16 %v445
    %v686 = vunpack.c.l.b16 %v446
    %v687 = vunpack.c.l.b16 %v447
    %v688 = vunpack.c.l.b16 %v448
    %v689 = vunpack.c.l.b16 %v449
    %v690 = vunpack.c.l.b16 %v450
    %v691 = vunpack.c.l.b16 %v451
    %v692 = vunpack.c.l.b16 %v452
    %v693 = vunpack.c.l.b16 %v453
    %v694 = vunpack.c.l.b16 %v454
    %v695 = vunpack.c.l.b16 %v455
    %v696 = vunpack.c.l.b16 %v456
    %v697 = vunpack.c.l.b16 %v457
    %v698 = vpack.c.b16 %v683, %v682
    %v699 = vpack.c.b16 %v685, %v684
    %v700 = vpack.c.b16 %v687, %v686
    %v701 = vpack.c.b16 %v689, %v688
    %v702 = vpack.c.b16 %v691, %v690
    %v703 = vpack.c.b16 %v693, %v692
    %v704 = vpack.c.b16 %v695, %v694
    %v705 = vpack.c.b16 %v697, %v696
    %714 = vmatpush.bf16.msra.mxu0 %v705
    %715 = vmatpush.bf16.msra.mxu0 %v704
    %716 = vmatpush.bf16.msra.mxu0 %v703
    %717 = vmatpush.bf16.msra.mxu0 %v702
    %718 = vmatpush.bf16.msra.mxu0 %v701
    %719 = vmatpush.bf16.msra.mxu0 %v700
    %720 = vmatpush.bf16.msra.mxu0 %v699
    %721 = vmatpush.bf16.msra.mxu0 %v698
    %722 = vmatmul.bf16.gmra.mxu0 %v643
    %v723 = vpop.f32.mrf.mxu0
    %v724 = vadd.f32 %v662, %v723
    %v725 = vpop.f32.mrf.mxu0
    %v726 = vadd.f32 %v664, %v725
    %727 = vdwg.mxu0
    %v728 = vperm.slane %v61, 1
    %v729 = vadd.f32 %v724, %v728
    %v730 = vadd.f32 %v726, %v728
    %v731 = vmax.f32 %v729, 0.0
    %v732 = vmax.f32 %v730, 0.0
    %v733 = vadd.f32 %v438, %v731
    %v734 = vadd.f32 %v439, %v732
    %735 = vst [vmem:[#allocation5] sm:$0xff] %v733
    %736 = vst [vmem:[#allocation5 + $0x8] sm:$0xff] %v734
    // Predicated region
    $region30: #{residual_block_fused.1} parent=1 // pred_check
      _
    $region31: #{residual_block_fused.1} parent=1 // pred_check_branch
      %738 = sbr.rel (0) target = $region33
    $region32: #{residual_block_fused.1} parent=1 // pred_region
      %740 = vsyncadd [#allocation4], 0
      %s741 = sshll.u32 [#allocation5], 4
      %s742 = int_to_ptr.vmem [resolvable:$true] %s741
      %s743 = sshll.u32 %s6, 4
      %s744 = int_to_ptr.hbm [resolvable:$true] %s743
      %749 = dma.vmem_to_hbm [thread:$0]  %s742, 256, %s744, [#allocation4], 128, 128, 8
    $region33: #{residual_block_fused.1} parent=1 // pred_fallthru
      _
    // Predicated region
    $region34: #{residual_block_fused.1} parent=1 // pred_check
      _
    $region35: #{residual_block_fused.1} parent=1 // pred_check_branch
      %751 = sbr.rel (0) target = $region37
    $region36: #{residual_block_fused.1} parent=1 // pred_region
      %753 = dma.done [#allocation4], 256
    $region37: #{residual_block_fused.1} parent=1 // pred_fallthru
      _
    %754 = vsyncpa [#allocation3], 1
    %755 = vsyncpa [#allocation4], 1

</llo_original>
